<compile_context>
chip_gen: v7x
topology: tpu7x:2x2x1
jax: 0.10.0
libtpu: 0.0.40
codegen_flags: <defaults>
</compile_context>

<pallas_src>
import jax
import jax.numpy as jnp
from jax.experimental import pallas as pl
from jax.experimental.pallas import tpu as pltpu

# ---- synthetic "input_config" ----
NB = 2          # batch size
V  = 64         # nMaxVoxels (pillars)
P  = 16         # nMaxPoints per pillar
F  = 4          # num_point_features (x, y, z, intensity)
C  = 32         # pp_num_filters[-1]
NX = 16         # pseudo-image width  (x grid cells)
NY = 16         # pseudo-image height (y grid cells)
VX = 0.5        # x_grid_size (voxel size x)
VY = 0.5        # y_grid_size (voxel size y)
X_MIN = 0.0
Y_MIN = -4.0
X_OFFSET = VX / 2.0 + X_MIN
Y_OFFSET = VY / 2.0 + Y_MIN

NBV = NB * V            # 128 -> lane-dense minor dim inside the kernel
K_AUG = F + 5 + 1       # 9 decorated point features + 1 constant "bias" feature = 10


def pfn_kernel(vox_ref, meta_ref, w_ref, out_ref):
    """PillarFeatureNet (single PFNLayer, use_norm=False, last_layer=True).

    Layout (batch folded into the pillar/lane axis, feature-major):
      vox_ref : [F, P, NBV]          point features, minor dim = pillars (128 lanes)
      meta_ref: [3, 1, NBV]          rows = (num_points, coord_x, coord_y), float
      w_ref   : [C*P, K_AUG*P]       kron([W; b].T, eye(P)) -> one fused matmul incl. bias
      out_ref : [C, NBV]             lane-dense per-pillar features
    """
    vox = vox_ref[...]                # [F, P, NBV]
    meta = meta_ref[...]              # [3, 1, NBV]
    npts = meta[0:1]                  # [1, 1, NBV]
    cx = meta[1:2]                    # [1, 1, NBV]  x voxel index (float)
    cy = meta[2:3]                    # [1, 1, NBV]  y voxel index (float)

    # --- decorate points: offsets from cluster mean and from pillar center ---
    xyz = vox[0:3]                                            # [3, P, NBV]
    # PyTorch divides by num_points with no clamp; the clamp only changes padded
    # pillars, whose features are never scattered into the canvas.
    divisor = jnp.maximum(npts, 1.0)                          # [1, 1, NBV]
    points_mean = jnp.sum(xyz, axis=1, keepdims=True) / divisor
    f_cluster = xyz - points_mean                             # [3, P, NBV]

    f_cx = vox[0:1] - (cx * VX + X_OFFSET)                    # [1, P, NBV]
    f_cy = vox[1:2] - (cy * VY + Y_OFFSET)                    # [1, P, NBV]

    # --- zero out padded points (get_paddings_indicator) ---
    pid = jax.lax.broadcasted_iota(jnp.int32, (1, P, NBV), 1).astype(jnp.float32)
    mask = (pid < npts).astype(jnp.float32)                   # [1, P, NBV]

    # Bias row is a constant 1 and is NOT masked: padded points still receive the bias
    # before the ReLU+max, matching the PyTorch use_norm=False semantics.
    ones = jnp.ones((1, P, NBV), jnp.float32)
    aug = jnp.concatenate(
        [vox * mask, f_cluster * mask, f_cx * mask, f_cy * mask, ones],
        axis=0)                                               # [K_AUG, P, NBV]

    # Tile-preserving reshape (merging the leading K dim into the 16-row sublane dim)
    # followed by ONE fused MXU matmul that covers raw/cluster/center features + bias.
    aug2 = aug.reshape(K_AUG * P, NBV)                        # [160, 128]
    lin = jnp.dot(w_ref[...], aug2,
                  preferred_element_type=jnp.float32)         # [C*P, NBV] = [512, 128]

    act = jnp.maximum(lin, 0.0)                               # ReLU
    out_ref[...] = jnp.max(act.reshape(C, P, NBV), axis=1)    # max over points -> [C, NBV]


def pillar_features_pallas(voxels, num_points, coordinates, w, b):
    """Run the fused PFN kernel over the whole (batch-folded) problem.

    Returns channel-major per-pillar features [nB, C, V].
    """
    nb = voxels.shape[0]
    nbv = nb * V

    # ---- layout plumbing (wrapper-side): feature-major, batch folded into lanes ----
    vox_t = voxels.transpose(3, 2, 0, 1).reshape(F, P, nbv)   # [F, P, nb*V]
    npts_f = num_points.astype(jnp.float32).reshape(nbv)
    cx = coordinates[..., 2].astype(jnp.float32).reshape(nbv)
    cy = coordinates[..., 1].astype(jnp.float32).reshape(nbv)
    meta = jnp.stack([npts_f, cx, cy], axis=0)[:, None, :]    # [3, 1, nb*V]

    # ---- parameter packing: single weight plane, bias folded in as an extra row ----
    # wbig[(c,p), (k,p')] = w_aug[k, c] * delta(p, p')  -> one [C*P, K_AUG*P] matmul
    w_aug = jnp.concatenate([w, b[None, :]], axis=0)          # [K_AUG, C]
    wbig = jnp.kron(w_aug.T, jnp.eye(P, dtype=w.dtype))       # [C*P, K_AUG*P] = [512, 160]

    feats_cn = pl.pallas_call(
        pfn_kernel,
        out_shape=jax.ShapeDtypeStruct((C, nbv), jnp.float32),
        grid_spec=pltpu.PrefetchScalarGridSpec(
            num_scalar_prefetch=0,
            grid=(1,),                                        # single step: whole problem fits VMEM
            in_specs=[
                pl.BlockSpec((F, P, nbv), lambda i: (0, 0, 0)),
                pl.BlockSpec((3, 1, nbv), lambda i: (0, 0, 0)),
                pl.BlockSpec((C * P, K_AUG * P), lambda i: (0, 0)),
            ],
            out_specs=pl.BlockSpec((C, nbv), lambda i: (0, 0)),
        ),
        compiler_params=pltpu.CompilerParams(
            dimension_semantics=("arbitrary",)),
    )(vox_t, meta, wbig)

    # [C, nb*V] -> [nb, C, V] (major-dim permute only; last dim untouched)
    return feats_cn.reshape(C, nb, V).transpose(1, 0, 2)


def scatter_to_pseudo_image(features_ncv, coordinates, num_nonempty):
    """PointPillarsScatter: canvas[:, :, y*nx + x] = features, only the first
    num_nonempty[b] pillars (matches PyTorch slicing voxels[b][:n]).  Returns NCHW
    directly (channel-major canvas -> no post-kernel transpose).
    """
    # TODO(synk): data-dependent scatter kept in plain JAX (glue), not fused in-kernel.
    nb = features_ncv.shape[0]
    idx = coordinates[..., 1] * NX + coordinates[..., 2]       # y * nx + x, [nB, V]
    valid = jnp.arange(V)[None, :] < num_nonempty[:, None]
    idx = jnp.where(valid, idx, NY * NX)                       # OOB -> dropped
    canvas = jnp.zeros((nb, C, NY * NX), features_ncv.dtype)
    canvas = jax.vmap(
        lambda cv, i, f: cv.at[:, i].set(f, mode="drop"))(canvas, idx, features_ncv)
    return canvas.reshape(nb, C, NY, NX)                       # [nB, C, ny, nx] (NCHW)


@jax.jit
def pillar_of_fafe_forward(voxels, num_points, coordinates, num_nonempty, w, b):
    feats = pillar_features_pallas(voxels, num_points, coordinates, w, b)  # [nB, C, V]
    return scatter_to_pseudo_image(feats, coordinates, num_nonempty)


def reference_forward(voxels, num_points, coordinates, num_nonempty, w, b):
    """Pure-JAX reference reproducing the PyTorch math (for validation)."""
    npts = num_points.astype(jnp.float32)[:, :, None, None]
    xyz = voxels[..., 0:3]
    points_mean = xyz.sum(axis=2, keepdims=True) / jnp.maximum(npts, 1.0)
    f_cluster = xyz - points_mean
    cfx = coordinates[..., 2].astype(jnp.float32)[:, :, None]
    cfy = coordinates[..., 1].astype(jnp.float32)[:, :, None]
    f_center_x = voxels[..., 0] - (cfx * VX + X_OFFSET)
    f_center_y = voxels[..., 1] - (cfy * VY + Y_OFFSET)
    f_center = jnp.stack([f_center_x, f_center_y], axis=-1)
    aug = jnp.concatenate([voxels, f_cluster, f_center], axis=-1)   # [nB, V, P, 9]
    pmask = (jnp.arange(P)[None, None, :] < num_points[:, :, None]).astype(jnp.float32)
    aug = aug * pmask[..., None]
    x = jnp.maximum(jnp.einsum("bvpf,fc->bvpc", aug, w) + b, 0.0)
    feats = x.max(axis=2)                                           # [nB, V, C]
    return scatter_to_pseudo_image(feats.transpose(0, 2, 1), coordinates, num_nonempty)


if __name__ == "__main__":
    key = jax.random.PRNGKey(0)
    k_w, k_b, k_vox, k_np, k_coord = jax.random.split(key, 5)

    # deterministic parameters: PFNLayer Linear(F+5 -> C, bias=True)
    w = jax.random.normal(k_w, (F + 5, C), jnp.float32) * 0.1
    b = jax.random.normal(k_b, (C,), jnp.float32) * 0.1

    # synthetic inputs (shapes as implied by PillarOfFafe.forward)
    num_points = jax.random.randint(k_np, (NB, V), 1, P + 1, dtype=jnp.int32)   # [nB, V]

    coords = []
    for bi in range(NB):                                      # unique (y, x) per batch
        perm = jax.random.permutation(jax.random.fold_in(k_coord, bi), NY * NX)[:V]
        yy = (perm // NX).astype(jnp.int32)
        xx = (perm % NX).astype(jnp.int32)
        zz = jnp.zeros_like(yy)
        coords.append(jnp.stack([zz, yy, xx], axis=-1))
    coordinates = jnp.stack(coords, axis=0)                   # [nB, V, 3], (z, y, x)

    voxels = jax.random.normal(k_vox, (NB, V, P, F), jnp.float32)
    pmask = jnp.arange(P)[None, None, :] < num_points[:, :, None]
    voxels = voxels * pmask[..., None].astype(jnp.float32)    # padded points are zero

    num_nonempty = jnp.array([V - 14, V - 24], dtype=jnp.int32)   # [nB]

    out = pillar_of_fafe_forward(voxels, num_points, coordinates, num_nonempty, w, b)
    out = jax.block_until_ready(out)
    assert out.shape == (NB, C, NY, NX), out.shape

    ref = reference_forward(voxels, num_points, coordinates, num_nonempty, w, b)
    max_err = float(jnp.max(jnp.abs(out - ref)))
    assert jnp.allclose(out, ref, atol=1e-2, rtol=1e-2), max_err

    print("KERNEL_OK")
</pallas_src>

<mosaic_0001>
module attributes {stable_mosaic.version = 11 : i64} {
  func.func @pfn_kernel(%arg0: i32, %arg1: memref<4x16x128xf32, #tpu.memory_space<vmem>>, %arg2: memref<3x1x128xf32, #tpu.memory_space<vmem>>, %arg3: memref<512x160xf32, #tpu.memory_space<vmem>>, %arg4: memref<32x128xf32, #tpu.memory_space<vmem>>) attributes {dimension_semantics = [#tpu.dimension_semantics<arbitrary>], iteration_bounds = array<i64: 1>, scalar_prefetch = 0 : i64, scratch_operands = 0 : i64, tpu.core_type = #tpu.core_type<tc>, window_params = [{pipeline_mode = #tpu.pipeline_mode<synchronous>, transform_indices = @transform_0, window_bounds = array<i64: 4, 16, 128>}, {pipeline_mode = #tpu.pipeline_mode<synchronous>, transform_indices = @transform_1, window_bounds = array<i64: 3, 1, 128>}, {pipeline_mode = #tpu.pipeline_mode<synchronous>, transform_indices = @transform_2, window_bounds = array<i64: 512, 160>}, {pipeline_mode = #tpu.pipeline_mode<synchronous>, transform_indices = @transform_3, window_bounds = array<i64: 32, 128>}]} {
    %c0 = arith.constant 0 : index
    %c0_0 = arith.constant 0 : index
    %c0_1 = arith.constant 0 : index
    %0 = vector.load %arg1[%c0, %c0_0, %c0_1] : memref<4x16x128xf32, #tpu.memory_space<vmem>>, vector<4x16x128xf32>
    %c0_2 = arith.constant 0 : index
    %c0_3 = arith.constant 0 : index
    %c0_4 = arith.constant 0 : index
    %1 = vector.load %arg2[%c0_2, %c0_3, %c0_4] : memref<3x1x128xf32, #tpu.memory_space<vmem>>, vector<3x1x128xf32>
    %2 = vector.extract_strided_slice %1 {offsets = [0, 0, 0], sizes = [1, 1, 128], strides = [1, 1, 1]} : vector<3x1x128xf32> to vector<1x1x128xf32>
    %3 = vector.extract_strided_slice %1 {offsets = [1, 0, 0], sizes = [1, 1, 128], strides = [1, 1, 1]} : vector<3x1x128xf32> to vector<1x1x128xf32>
    %4 = vector.extract_strided_slice %1 {offsets = [2, 0, 0], sizes = [1, 1, 128], strides = [1, 1, 1]} : vector<3x1x128xf32> to vector<1x1x128xf32>
    %5 = vector.extract_strided_slice %0 {offsets = [0, 0, 0], sizes = [3, 16, 128], strides = [1, 1, 1]} : vector<4x16x128xf32> to vector<3x16x128xf32>
    %cst = arith.constant 1.000000e+00 : f32
    %6 = vector.broadcast %cst : f32 to vector<1x1x128xf32>
    %7 = arith.maximumf %2, %6 : vector<1x1x128xf32>
    %cst_5 = arith.constant dense<0.000000e+00> : vector<3x128xf32>
    %8 = vector.multi_reduction <add>, %5, %cst_5 [1] : vector<3x16x128xf32> to vector<3x128xf32>
    %9 = vector.shape_cast %8 : vector<3x128xf32> to vector<3x1x128xf32>
    %10 = vector.broadcast %7 : vector<1x1x128xf32> to vector<3x1x128xf32>
    %11 = arith.divf %9, %10 : vector<3x1x128xf32>
    %12 = vector.broadcast %11 : vector<3x1x128xf32> to vector<3x16x128xf32>
    %13 = arith.subf %5, %12 : vector<3x16x128xf32>
    %14 = vector.extract_strided_slice %0 {offsets = [0, 0, 0], sizes = [1, 16, 128], strides = [1, 1, 1]} : vector<4x16x128xf32> to vector<1x16x128xf32>
    %cst_6 = arith.constant 5.000000e-01 : f32
    %15 = vector.broadcast %cst_6 : f32 to vector<1x1x128xf32>
    %16 = arith.mulf %3, %15 : vector<1x1x128xf32>
    %cst_7 = arith.constant 2.500000e-01 : f32
    %17 = vector.broadcast %cst_7 : f32 to vector<1x1x128xf32>
    %18 = arith.addf %16, %17 : vector<1x1x128xf32>
    %19 = vector.broadcast %18 : vector<1x1x128xf32> to vector<1x16x128xf32>
    %20 = arith.subf %14, %19 : vector<1x16x128xf32>
    %21 = vector.extract_strided_slice %0 {offsets = [1, 0, 0], sizes = [1, 16, 128], strides = [1, 1, 1]} : vector<4x16x128xf32> to vector<1x16x128xf32>
    %cst_8 = arith.constant 5.000000e-01 : f32
    %22 = vector.broadcast %cst_8 : f32 to vector<1x1x128xf32>
    %23 = arith.mulf %4, %22 : vector<1x1x128xf32>
    %cst_9 = arith.constant -3.750000e+00 : f32
    %24 = vector.broadcast %cst_9 : f32 to vector<1x1x128xf32>
    %25 = arith.addf %23, %24 : vector<1x1x128xf32>
    %26 = vector.broadcast %25 : vector<1x1x128xf32> to vector<1x16x128xf32>
    %27 = arith.subf %21, %26 : vector<1x16x128xf32>
    %28 = tpu.iota {dimensions = array<i32: 1>} : vector<1x16x128xi32>
    %29 = arith.sitofp %28 : vector<1x16x128xi32> to vector<1x16x128xf32>
    %30 = vector.broadcast %2 : vector<1x1x128xf32> to vector<1x16x128xf32>
    %31 = arith.cmpf olt, %29, %30 : vector<1x16x128xf32>
    %32 = arith.extui %31 : vector<1x16x128xi1> to vector<1x16x128xi32>
    %33 = arith.sitofp %32 : vector<1x16x128xi32> to vector<1x16x128xf32>
    %cst_10 = arith.constant 1.000000e+00 : f32
    %34 = vector.broadcast %cst_10 : f32 to vector<1x16x128xf32>
    %35 = vector.broadcast %33 : vector<1x16x128xf32> to vector<4x16x128xf32>
    %36 = arith.mulf %0, %35 : vector<4x16x128xf32>
    %37 = vector.broadcast %33 : vector<1x16x128xf32> to vector<3x16x128xf32>
    %38 = arith.mulf %13, %37 : vector<3x16x128xf32>
    %39 = arith.mulf %20, %33 : vector<1x16x128xf32>
    %40 = arith.mulf %27, %33 : vector<1x16x128xf32>
    %41 = tpu.concatenate %36, %38, %39, %40, %34 in 0 : vector<4x16x128xf32>, vector<3x16x128xf32>, vector<1x16x128xf32>, vector<1x16x128xf32>, vector<1x16x128xf32> -> vector<10x16x128xf32>
    %42 = vector.shape_cast %41 : vector<10x16x128xf32> to vector<160x128xf32>
    %c0_11 = arith.constant 0 : index
    %c0_12 = arith.constant 0 : index
    %43 = vector.load %arg3[%c0_11, %c0_12] : memref<512x160xf32, #tpu.memory_space<vmem>>, vector<512x160xf32>
    %cst_13 = arith.constant dense<0.000000e+00> : vector<512x128xf32>
    %44 = tpu.matmul %43, %42, %cst_13 {dimension_numbers = #tpu.dot_dimension_numbers<[1], [0], [0], [1], [0, 0, 1, 1], [], []>} : vector<512x160xf32>, vector<160x128xf32>, vector<512x128xf32> -> vector<512x128xf32>
    %cst_14 = arith.constant 0.000000e+00 : f32
    %45 = vector.broadcast %cst_14 : f32 to vector<512x128xf32>
    %46 = arith.maximumf %44, %45 : vector<512x128xf32>
    %47 = vector.shape_cast %46 : vector<512x128xf32> to vector<32x16x128xf32>
    %cst_15 = arith.constant dense<0xFF800000> : vector<32x128xf32>
    %48 = vector.multi_reduction <maximumf>, %47, %cst_15 [1] : vector<32x16x128xf32> to vector<32x128xf32>
    %c0_16 = arith.constant 0 : index
    %c0_17 = arith.constant 0 : index
    %49 = vector.load %arg4[%c0_16, %c0_17] : memref<32x128xf32, #tpu.memory_space<vmem>>, vector<32x128xf32>
    tpu.vector_store %arg4[%c0_16, %c0_17], %48 {strides = array<i32>} : memref<32x128xf32, #tpu.memory_space<vmem>>, vector<32x128xf32>,
    return
  }
  func.func @transform_0(%arg0: i32) -> (i32, i32, i32) {
    %c0_i32 = arith.constant 0 : i32
    %c0_i32_0 = arith.constant 0 : i32
    %c0_i32_1 = arith.constant 0 : i32
    %c0_i32_2 = arith.constant 0 : i32
    return %c0_i32, %c0_i32_0, %c0_i32_1 : i32, i32, i32
  }
  func.func @transform_1(%arg0: i32) -> (i32, i32, i32) {
    %c0_i32 = arith.constant 0 : i32
    %c0_i32_0 = arith.constant 0 : i32
    %c0_i32_1 = arith.constant 0 : i32
    %c0_i32_2 = arith.constant 0 : i32
    return %c0_i32, %c0_i32_0, %c0_i32_1 : i32, i32, i32
  }
  func.func @transform_2(%arg0: i32) -> (i32, i32) {
    %c0_i32 = arith.constant 0 : i32
    %c0_i32_0 = arith.constant 0 : i32
    %c0_i32_1 = arith.constant 0 : i32
    return %c0_i32, %c0_i32_0 : i32, i32
  }
  func.func @transform_3(%arg0: i32) -> (i32, i32) {
    %c0_i32 = arith.constant 0 : i32
    %c0_i32_0 = arith.constant 0 : i32
    %c0_i32_1 = arith.constant 0 : i32
    return %c0_i32, %c0_i32_0 : i32, i32
  }
}

</mosaic_0001>

<llo_original>
// kernel: pillar_of_fafe_forward.1
$region0: #{pillar_of_fafe_forward.1}
  #allocation0 [shape = 'u32[]', space=smem, size = 0x4, offset = 0x4, fixed_abs, tag = 'smem constant byte address 0x4 - core index']
  #allocation1 [shape = 'u32[144,128]{1,0:T(1,128)}', space=vmem, size = 0x12000, scoped, tag = 'internal scratch']
  %s0 = inlined_call_operand.vmem [shape: f32[4,16,128], index: 0, kind: input, shape index: {}]
  %s1 = inlined_call_operand.vmem [shape: f32[3,1,128], index: 1, kind: input, shape index: {}]
  %s2 = inlined_call_operand.vmem [shape: f32[512,160], index: 2, kind: input, shape index: {}]
  %s3 = inlined_call_operand.vmem [shape: f32[32,128], index: 3, kind: output, shape index: {}]
  %s4 = sld [smem:[#allocation0]]
  $region22: #{pillar_of_fafe_forward.1} parent=0
    _
  %s6 = ssub.s32 1, %s4
  %s7 = scalar_select 0, %s6, %s4
  // Predicated region
  $region2: #{pillar_of_fafe_forward.1} parent=0 // pred_check
    _
  $region3: #{pillar_of_fafe_forward.1} parent=0 // pred_check_branch
    %9 = sbr.rel (0) target = $region5
  $region4: #{pillar_of_fafe_forward.1} parent=0 // pred_region
    _
  $region5: #{pillar_of_fafe_forward.1} parent=0 // pred_fallthru
    _
  // Predicated region
  $region6: #{pillar_of_fafe_forward.1} parent=0 // pred_check
    _
  $region7: #{pillar_of_fafe_forward.1} parent=0 // pred_check_branch
    %11 = sbr.rel (0) target = $region9
  $region8: #{pillar_of_fafe_forward.1} parent=0 // pred_region
    _
  $region9: #{pillar_of_fafe_forward.1} parent=0 // pred_fallthru
    _
  // Predicated region
  $region10: #{pillar_of_fafe_forward.1} parent=0 // pred_check
    _
  $region11: #{pillar_of_fafe_forward.1} parent=0 // pred_check_branch
    %13 = sbr.rel (0) target = $region13
  $region12: #{pillar_of_fafe_forward.1} parent=0 // pred_region
    _
  $region13: #{pillar_of_fafe_forward.1} parent=0 // pred_fallthru
    _
  %v14 = vld [vmem:[%s0] sm:$0xff]
  %v15 = vld [vmem:[%s0 + $0x8] sm:$0xff]
  %v16 = vld [vmem:[%s0 + $0x10] sm:$0xff]
  %v17 = vld [vmem:[%s0 + $0x18] sm:$0xff]
  %v18 = vld [vmem:[%s0 + $0x20] sm:$0xff]
  %v19 = vld [vmem:[%s0 + $0x28] sm:$0xff]
  %v20 = vld [vmem:[%s0 + $0x30] sm:$0xff]
  %v21 = vld [vmem:[%s0 + $0x38] sm:$0xff]
  %v22 = vld [vmem:[%s1] sm:$0x1]
  %v23 = vld [vmem:[%s1 + $0x1] sm:$0x1]
  %v24 = vld [vmem:[%s1 + $0x2] sm:$0x1]
  %v25 = vmax.f32 %v22, 1.0
  %v26 = vadd.f32 %v14, %v15
  %v27 = vrot.slane %v26, 4
  %v28 = vadd.f32 %v26, %v27
  %v29 = vrot.slane %v28, 2
  %v30 = vadd.f32 %v28, %v29
  %v31 = vrot.slane %v30, 1
  %v32 = vadd.f32 %v30, %v31
  %v33 = vadd.f32 %v16, %v17
  %v34 = vrot.slane %v33, 4
  %v35 = vadd.f32 %v33, %v34
  %v36 = vrot.slane %v35, 2
  %v37 = vadd.f32 %v35, %v36
  %v38 = vrot.slane %v37, 1
  %v39 = vadd.f32 %v37, %v38
  %v40 = vadd.f32 %v18, %v19
  %v41 = vrot.slane %v40, 4
  %v42 = vadd.f32 %v40, %v41
  %v43 = vrot.slane %v42, 2
  %v44 = vadd.f32 %v42, %v43
  %v45 = vrot.slane %v44, 1
  %v46 = vadd.f32 %v44, %v45
  %v47 = vrcp.pop %v25
  %v48 = vmul.f32 %v32, %v47
  %v49 = vmul.f32 %v39, %v47
  %v50 = vmul.f32 %v46, %v47
  %v51 = vlaneseq
  %v52 = vshrl.u32 %v51, 7
  %v53 = vsub.s32 0, %v52
  %v54 = vrot.slane %v48, %v53
  %v55 = vlaneseq
  %v56 = vshrl.u32 %v55, 7
  %v57 = vsub.s32 0, %v56
  %v58 = vrot.slane %v49, %v57
  %v59 = vlaneseq
  %v60 = vshrl.u32 %v59, 7
  %v61 = vsub.s32 0, %v60
  %v62 = vrot.slane %v50, %v61
  %v63 = vsub.f32 %v14, %v54
  %v64 = vsub.f32 %v15, %v54
  %v65 = vsub.f32 %v16, %v58
  %v66 = vsub.f32 %v17, %v58
  %v67 = vsub.f32 %v18, %v62
  %v68 = vsub.f32 %v19, %v62
  %v69 = vmul.f32 %v23, 0.5
  %v70 = vadd.f32 %v69, 0.25
  %v72 = vlaneseq
  %v73 = vshrl.u32 %v72, 7
  %v74 = vsub.s32 0, %v73
  %v75 = vrot.slane %v70, %v74
  %v77 = vsub.f32 %v14, %v75
  %v78 = vsub.f32 %v15, %v75
  %v79 = vmul.f32 %v24, 0.5
  %v80 = vadd.f32 %v79, -3.75
  %v82 = vlaneseq
  %v83 = vshrl.u32 %v82, 7
  %v84 = vsub.s32 0, %v83
  %v85 = vrot.slane %v80, %v84
  %v87 = vsub.f32 %v16, %v85
  %v88 = vsub.f32 %v17, %v85
  %v89 = vlaneseq
  %v90 = vshrl.u32 %v89, 7
  %v91 = vadd.s32 %v90, 8
  %v92 = vcvt.s32.f32 %v90
  %v93 = vcvt.s32.f32 %v91
  %v95 = vlaneseq
  %v96 = vshrl.u32 %v95, 7
  %v97 = vsub.s32 0, %v96
  %v98 = vrot.slane %v22, %v97
  %vm100 = vcmp.lt.f32.partialorder %v92, %v98
  %vm101 = vcmp.lt.f32.partialorder %v93, %v98
  %v102 = vsel %vm100, 1, 0
  %v103 = vsel %vm101, 1, 0
  %v104 = vcvt.s32.f32 %v102
  %v105 = vcvt.s32.f32 %v103
  %v106 = vmul.f32 %v14, %v104
  %v107 = vmul.f32 %v15, %v105
  %v108 = vmul.f32 %v16, %v104
  %v109 = vmul.f32 %v17, %v105
  %v110 = vmul.f32 %v18, %v104
  %v111 = vmul.f32 %v19, %v105
  %v112 = vmul.f32 %v20, %v104
  %v113 = vmul.f32 %v21, %v105
  %v114 = vmul.f32 %v63, %v104
  %v115 = vmul.f32 %v64, %v105
  %v116 = vmul.f32 %v65, %v104
  %v117 = vmul.f32 %v66, %v105
  %v118 = vmul.f32 %v67, %v104
  %v119 = vmul.f32 %v68, %v105
  %v120 = vmul.f32 %v77, %v104
  %v121 = vmul.f32 %v78, %v105
  %v122 = vmul.f32 %v87, %v104
  %v123 = vmul.f32 %v88, %v105
  %v124 = vld [vmem:[%s2] sm:$0xff]
  %v125 = vld [vmem:[%s2 + $0x8] sm:$0xff]
  %v126 = vld [vmem:[%s2 + $0x10] sm:$0xff]
  %v127 = vld [vmem:[%s2 + $0x18] sm:$0xff]
  %v128 = vld [vmem:[%s2 + $0x20] sm:$0xff]
  %v129 = vld [vmem:[%s2 + $0x28] sm:$0xff]
  %v130 = vld [vmem:[%s2 + $0x30] sm:$0xff]
  %v131 = vld [vmem:[%s2 + $0x38] sm:$0xff]
  %v132 = vld [vmem:[%s2 + $0x40] sm:$0xff]
  %v133 = vld [vmem:[%s2 + $0x48] sm:$0xff]
  %v134 = vld [vmem:[%s2 + $0x50] sm:$0xff]
  %v135 = vld [vmem:[%s2 + $0x58] sm:$0xff]
  %v136 = vld [vmem:[%s2 + $0x60] sm:$0xff]
  %v137 = vld [vmem:[%s2 + $0x68] sm:$0xff]
  %v138 = vld [vmem:[%s2 + $0x70] sm:$0xff]
  %v139 = vld [vmem:[%s2 + $0x78] sm:$0xff]
  %v140 = vld [vmem:[%s2 + $0x80] sm:$0xff]
  %v141 = vld [vmem:[%s2 + $0x88] sm:$0xff]
  %v142 = vld [vmem:[%s2 + $0x90] sm:$0xff]
  %v143 = vld [vmem:[%s2 + $0x98] sm:$0xff]
  %v144 = vld [vmem:[%s2 + $0xa0] sm:$0xff]
  %v145 = vld [vmem:[%s2 + $0xa8] sm:$0xff]
  %v146 = vld [vmem:[%s2 + $0xb0] sm:$0xff]
  %v147 = vld [vmem:[%s2 + $0xb8] sm:$0xff]
  %v148 = vld [vmem:[%s2 + $0xc0] sm:$0xff]
  %v149 = vld [vmem:[%s2 + $0xc8] sm:$0xff]
  %v150 = vld [vmem:[%s2 + $0xd0] sm:$0xff]
  %v151 = vld [vmem:[%s2 + $0xd8] sm:$0xff]
  %v152 = vld [vmem:[%s2 + $0xe0] sm:$0xff]
  %v153 = vld [vmem:[%s2 + $0xe8] sm:$0xff]
  %v154 = vld [vmem:[%s2 + $0xf0] sm:$0xff]
  %v155 = vld [vmem:[%s2 + $0xf8] sm:$0xff]
  %v156 = vld [vmem:[%s2 + $0x100] sm:$0xff]
  %v157 = vld [vmem:[%s2 + $0x108] sm:$0xff]
  %v158 = vld [vmem:[%s2 + $0x110] sm:$0xff]
  %v159 = vld [vmem:[%s2 + $0x118] sm:$0xff]
  %v160 = vld [vmem:[%s2 + $0x120] sm:$0xff]
  %v161 = vld [vmem:[%s2 + $0x128] sm:$0xff]
  %v162 = vld [vmem:[%s2 + $0x130] sm:$0xff]
  %v163 = vld [vmem:[%s2 + $0x138] sm:$0xff]
  %v164 = vld [vmem:[%s2 + $0x140] sm:$0xff]
  %v165 = vld [vmem:[%s2 + $0x148] sm:$0xff]
  %v166 = vld [vmem:[%s2 + $0x150] sm:$0xff]
  %v167 = vld [vmem:[%s2 + $0x158] sm:$0xff]
  %v168 = vld [vmem:[%s2 + $0x160] sm:$0xff]
  %v169 = vld [vmem:[%s2 + $0x168] sm:$0xff]
  %v170 = vld [vmem:[%s2 + $0x170] sm:$0xff]
  %v171 = vld [vmem:[%s2 + $0x178] sm:$0xff]
  %v172 = vld [vmem:[%s2 + $0x180] sm:$0xff]
  %v173 = vld [vmem:[%s2 + $0x188] sm:$0xff]
  %v174 = vld [vmem:[%s2 + $0x190] sm:$0xff]
  %v175 = vld [vmem:[%s2 + $0x198] sm:$0xff]
  %v176 = vld [vmem:[%s2 + $0x1a0] sm:$0xff]
  %v177 = vld [vmem:[%s2 + $0x1a8] sm:$0xff]
  %v178 = vld [vmem:[%s2 + $0x1b0] sm:$0xff]
  %v179 = vld [vmem:[%s2 + $0x1b8] sm:$0xff]
  %v180 = vld [vmem:[%s2 + $0x1c0] sm:$0xff]
  %v181 = vld [vmem:[%s2 + $0x1c8] sm:$0xff]
  %v182 = vld [vmem:[%s2 + $0x1d0] sm:$0xff]
  %v183 = vld [vmem:[%s2 + $0x1d8] sm:$0xff]
  %v184 = vld [vmem:[%s2 + $0x1e0] sm:$0xff]
  %v185 = vld [vmem:[%s2 + $0x1e8] sm:$0xff]
  %v186 = vld [vmem:[%s2 + $0x1f0] sm:$0xff]
  %v187 = vld [vmem:[%s2 + $0x1f8] sm:$0xff]
  %v188 = vld [vmem:[%s2 + $0x200] sm:$0xff]
  %v189 = vld [vmem:[%s2 + $0x208] sm:$0xff]
  %v190 = vld [vmem:[%s2 + $0x210] sm:$0xff]
  %v191 = vld [vmem:[%s2 + $0x218] sm:$0xff]
  %v192 = vld [vmem:[%s2 + $0x220] sm:$0xff]
  %v193 = vld [vmem:[%s2 + $0x228] sm:$0xff]
  %v194 = vld [vmem:[%s2 + $0x230] sm:$0xff]
  %v195 = vld [vmem:[%s2 + $0x238] sm:$0xff]
  %v196 = vld [vmem:[%s2 + $0x240] sm:$0xff]
  %v197 = vld [vmem:[%s2 + $0x248] sm:$0xff]
  %v198 = vld [vmem:[%s2 + $0x250] sm:$0xff]
  %v199 = vld [vmem:[%s2 + $0x258] sm:$0xff]
  %v200 = vld [vmem:[%s2 + $0x260] sm:$0xff]
  %v201 = vld [vmem:[%s2 + $0x268] sm:$0xff]
  %v202 = vld [vmem:[%s2 + $0x270] sm:$0xff]
  %v203 = vld [vmem:[%s2 + $0x278] sm:$0xff]
  %v204 = vld [vmem:[%s2 + $0x280] sm:$0xff]
  %v205 = vld [vmem:[%s2 + $0x288] sm:$0xff]
  %v206 = vld [vmem:[%s2 + $0x290] sm:$0xff]
  %v207 = vld [vmem:[%s2 + $0x298] sm:$0xff]
  %v208 = vld [vmem:[%s2 + $0x2a0] sm:$0xff]
  %v209 = vld [vmem:[%s2 + $0x2a8] sm:$0xff]
  %v210 = vld [vmem:[%s2 + $0x2b0] sm:$0xff]
  %v211 = vld [vmem:[%s2 + $0x2b8] sm:$0xff]
  %v212 = vld [vmem:[%s2 + $0x2c0] sm:$0xff]
  %v213 = vld [vmem:[%s2 + $0x2c8] sm:$0xff]
  %v214 = vld [vmem:[%s2 + $0x2d0] sm:$0xff]
  %v215 = vld [vmem:[%s2 + $0x2d8] sm:$0xff]
  %v216 = vld [vmem:[%s2 + $0x2e0] sm:$0xff]
  %v217 = vld [vmem:[%s2 + $0x2e8] sm:$0xff]
  %v218 = vld [vmem:[%s2 + $0x2f0] sm:$0xff]
  %v219 = vld [vmem:[%s2 + $0x2f8] sm:$0xff]
  %v220 = vld [vmem:[%s2 + $0x300] sm:$0xff]
  %v221 = vld [vmem:[%s2 + $0x308] sm:$0xff]
  %v222 = vld [vmem:[%s2 + $0x310] sm:$0xff]
  %v223 = vld [vmem:[%s2 + $0x318] sm:$0xff]
  %v224 = vld [vmem:[%s2 + $0x320] sm:$0xff]
  %v225 = vld [vmem:[%s2 + $0x328] sm:$0xff]
  %v226 = vld [vmem:[%s2 + $0x330] sm:$0xff]
  %v227 = vld [vmem:[%s2 + $0x338] sm:$0xff]
  %v228 = vld [vmem:[%s2 + $0x340] sm:$0xff]
  %v229 = vld [vmem:[%s2 + $0x348] sm:$0xff]
  %v230 = vld [vmem:[%s2 + $0x350] sm:$0xff]
  %v231 = vld [vmem:[%s2 + $0x358] sm:$0xff]
  %v232 = vld [vmem:[%s2 + $0x360] sm:$0xff]
  %v233 = vld [vmem:[%s2 + $0x368] sm:$0xff]
  %v234 = vld [vmem:[%s2 + $0x370] sm:$0xff]
  %v235 = vld [vmem:[%s2 + $0x378] sm:$0xff]
  %v236 = vld [vmem:[%s2 + $0x380] sm:$0xff]
  %v237 = vld [vmem:[%s2 + $0x388] sm:$0xff]
  %v238 = vld [vmem:[%s2 + $0x390] sm:$0xff]
  %v239 = vld [vmem:[%s2 + $0x398] sm:$0xff]
  %v240 = vld [vmem:[%s2 + $0x3a0] sm:$0xff]
  %v241 = vld [vmem:[%s2 + $0x3a8] sm:$0xff]
  %v242 = vld [vmem:[%s2 + $0x3b0] sm:$0xff]
  %v243 = vld [vmem:[%s2 + $0x3b8] sm:$0xff]
  %v244 = vld [vmem:[%s2 + $0x3c0] sm:$0xff]
  %v245 = vld [vmem:[%s2 + $0x3c8] sm:$0xff]
  %v246 = vld [vmem:[%s2 + $0x3d0] sm:$0xff]
  %v247 = vld [vmem:[%s2 + $0x3d8] sm:$0xff]
  %v248 = vld [vmem:[%s2 + $0x3e0] sm:$0xff]
  %v249 = vld [vmem:[%s2 + $0x3e8] sm:$0xff]
  %v250 = vld [vmem:[%s2 + $0x3f0] sm:$0xff]
  %v251 = vld [vmem:[%s2 + $0x3f8] sm:$0xff]
  %vm252 = vcmask 261120
  %v254 = vsel %vm252, %v125, 0
  %v257 = vsel %vm252, %v127, 0
  %v260 = vsel %vm252, %v129, 0
  %v263 = vsel %vm252, %v131, 0
  %v266 = vsel %vm252, %v133, 0
  %v269 = vsel %vm252, %v135, 0
  %v272 = vsel %vm252, %v137, 0
  %v275 = vsel %vm252, %v139, 0
  %v278 = vsel %vm252, %v141, 0
  %v281 = vsel %vm252, %v143, 0
  %v284 = vsel %vm252, %v145, 0
  %v287 = vsel %vm252, %v147, 0
  %v290 = vsel %vm252, %v149, 0
  %v293 = vsel %vm252, %v151, 0
  %v296 = vsel %vm252, %v153, 0
  %v299 = vsel %vm252, %v155, 0
  %v302 = vsel %vm252, %v157, 0
  %v305 = vsel %vm252, %v159, 0
  %v308 = vsel %vm252, %v161, 0
  %v311 = vsel %vm252, %v163, 0
  %v314 = vsel %vm252, %v165, 0
  %v317 = vsel %vm252, %v167, 0
  %v320 = vsel %vm252, %v169, 0
  %v323 = vsel %vm252, %v171, 0
  %v326 = vsel %vm252, %v173, 0
  %v329 = vsel %vm252, %v175, 0
  %v332 = vsel %vm252, %v177, 0
  %v335 = vsel %vm252, %v179, 0
  %v338 = vsel %vm252, %v181, 0
  %v341 = vsel %vm252, %v183, 0
  %v344 = vsel %vm252, %v185, 0
  %v347 = vsel %vm252, %v187, 0
  %v350 = vsel %vm252, %v189, 0
  %v353 = vsel %vm252, %v191, 0
  %v356 = vsel %vm252, %v193, 0
  %v359 = vsel %vm252, %v195, 0
  %v362 = vsel %vm252, %v197, 0
  %v365 = vsel %vm252, %v199, 0
  %v368 = vsel %vm252, %v201, 0
  %v371 = vsel %vm252, %v203, 0
  %v374 = vsel %vm252, %v205, 0
  %v377 = vsel %vm252, %v207, 0
  %v380 = vsel %vm252, %v209, 0
  %v383 = vsel %vm252, %v211, 0
  %v386 = vsel %vm252, %v213, 0
  %v389 = vsel %vm252, %v215, 0
  %v392 = vsel %vm252, %v217, 0
  %v395 = vsel %vm252, %v219, 0
  %v398 = vsel %vm252, %v221, 0
  %v401 = vsel %vm252, %v223, 0
  %v404 = vsel %vm252, %v225, 0
  %v407 = vsel %vm252, %v227, 0
  %v410 = vsel %vm252, %v229, 0
  %v413 = vsel %vm252, %v231, 0
  %v416 = vsel %vm252, %v233, 0
  %v419 = vsel %vm252, %v235, 0
  %v422 = vsel %vm252, %v237, 0
  %v425 = vsel %vm252, %v239, 0
  %v428 = vsel %vm252, %v241, 0
  %v431 = vsel %vm252, %v243, 0
  %v434 = vsel %vm252, %v245, 0
  %v437 = vsel %vm252, %v247, 0
  %v440 = vsel %vm252, %v249, 0
  %v443 = vsel %vm252, %v251, 0
  %445 = vmatprep.subr.mxu0 0.0
  %446 = vmatpush1.msra.mxu0 %v106
  %447 = vmatprep.subr.mxu0 0.0
  %448 = vmatpush1.msra.mxu0 %v107
  %449 = vmatprep.subr.mxu0 0.0
  %450 = vmatpush1.msra.mxu0 %v108
  %451 = vmatprep.subr.mxu0 0.0
  %452 = vmatpush1.msra.mxu0 %v109
  %453 = vmatprep.subr.mxu0 0.0
  %454 = vmatpush1.msra.mxu0 %v110
  %455 = vmatprep.subr.mxu0 0.0
  %456 = vmatpush1.msra.mxu0 %v111
  %457 = vmatprep.subr.mxu0 0.0
  %458 = vmatpush1.msra.mxu0 %v112
  %459 = vmatprep.subr.mxu0 0.0
  %460 = vmatpush1.msra.mxu0 %v113
  %461 = vmatprep.subr.mxu0 0.0
  %462 = vmatpush1.msra.mxu0 %v114
  %463 = vmatprep.subr.mxu0 0.0
  %464 = vmatpush1.msra.mxu0 %v115
  %465 = vmatprep.subr.mxu0 0.0
  %466 = vmatpush1.msra.mxu0 %v116
  %467 = vmatprep.subr.mxu0 0.0
  %468 = vmatpush1.msra.mxu0 %v117
  %469 = vmatprep.subr.mxu0 0.0
  %470 = vmatpush1.msra.mxu0 %v118
  %471 = vmatprep.subr.mxu0 0.0
  %472 = vmatpush1.msra.mxu0 %v119
  %473 = vmatprep.subr.mxu0 0.0
  %474 = vmatpush1.msra.mxu0 %v120
  %475 = vmatprep.subr.mxu0 0.0
  %476 = vmatpush1.msra.mxu0 %v121
  %477 = vmatprep.subr.mxu0 0.0
  %478 = vmatpush1.msra.mxu0 %v122
  %479 = vmatprep.subr.mxu0 0.0
  %480 = vmatpush1.msra.mxu0 %v123
  %481 = vmatprep.subr.mxu0 0.0
  %482 = vmatpush1.msra.mxu0 1.0
  %483 = vmatprep.subr.mxu0 0.0
  %484 = vmatpush1.msra.mxu0 1.0
  %485 = vmatprep.subr.mxu0 0.0
  %486 = vmatpush1.msra.mxu0 0.0
  %487 = vmatprep.subr.mxu0 0.0
  %488 = vmatpush1.msra.mxu0 0.0
  %489 = vmatprep.subr.mxu0 0.0
  %490 = vmatpush1.msra.mxu0 0.0
  %491 = vmatprep.subr.mxu0 0.0
  %492 = vmatpush1.msra.mxu0 0.0
  %493 = vmatprep.subr.mxu0 0.0
  %494 = vmatpush1.msra.mxu0 0.0
  %495 = vmatprep.subr.mxu0 0.0
  %496 = vmatpush1.msra.mxu0 0.0
  %497 = vmatprep.subr.mxu0 0.0
  %498 = vmatpush1.msra.mxu0 0.0
  %499 = vmatprep.subr.mxu0 0.0
  %500 = vmatpush1.msra.mxu0 0.0
  %501 = vmatprep.subr.mxu0 0.0
  %502 = vmatpush1.msra.mxu0 0.0
  %503 = vmatprep.subr.mxu0 0.0
  %504 = vmatpush1.msra.mxu0 0.0
  %505 = vmatprep.subr.mxu0 0.0
  %506 = vmatpush1.msra.mxu0 0.0
  %507 = vmatprep.subr.mxu0 0.0
  %508 = vmatpush1.msra.mxu0 0.0
  %509 = vmatprep.mubr.f32.mxu0 %v254
  %510 = vmatmul.mubr.f32.gmra.mrb[0].mxu0 %v124
  %v511 = vpop.f32.mrb[0].mxu0
  %v512 = vadd.f32 0.0, %v511
  %v513 = vpop.f32.mrb[0].mxu0
  %514 = vmatprep.mubr.f32.mxu0 %v257
  %515 = vmatmul.mubr.f32.gmra.mrb[0].mxu0 %v126
  %v516 = vpop.f32.mrb[0].mxu0
  %v517 = vadd.f32 0.0, %v516
  %v518 = vpop.f32.mrb[0].mxu0
  %519 = vmatprep.mubr.f32.mxu0 %v260
  %520 = vmatmul.mubr.f32.gmra.mrb[0].mxu0 %v128
  %v521 = vpop.f32.mrb[0].mxu0
  %v522 = vadd.f32 0.0, %v521
  %v523 = vpop.f32.mrb[0].mxu0
  %524 = vmatprep.mubr.f32.mxu0 %v263
  %525 = vmatmul.mubr.f32.gmra.mrb[0].mxu0 %v130
  %v526 = vpop.f32.mrb[0].mxu0
  %v527 = vadd.f32 0.0, %v526
  %v528 = vpop.f32.mrb[0].mxu0
  %529 = vmatprep.mubr.f32.mxu0 %v266
  %530 = vmatmul.mubr.f32.gmra.mrb[0].mxu0 %v132
  %v531 = vpop.f32.mrb[0].mxu0
  %v532 = vadd.f32 0.0, %v531
  %v533 = vpop.f32.mrb[0].mxu0
  %534 = vmatprep.mubr.f32.mxu0 %v269
  %535 = vmatmul.mubr.f32.gmra.mrb[0].mxu0 %v134
  %v536 = vpop.f32.mrb[0].mxu0
  %v537 = vadd.f32 0.0, %v536
  %v538 = vpop.f32.mrb[0].mxu0
  %539 = vmatprep.mubr.f32.mxu0 %v272
  %540 = vmatmul.mubr.f32.gmra.mrb[0].mxu0 %v136
  %v541 = vpop.f32.mrb[0].mxu0
  %v542 = vadd.f32 0.0, %v541
  %v543 = vpop.f32.mrb[0].mxu0
  %544 = vmatprep.mubr.f32.mxu0 %v275
  %545 = vmatmul.mubr.f32.gmra.mrb[0].mxu0 %v138
  %v546 = vpop.f32.mrb[0].mxu0
  %v547 = vadd.f32 0.0, %v546
  %v548 = vpop.f32.mrb[0].mxu0
  %549 = vmatprep.mubr.f32.mxu0 %v278
  %550 = vmatmul.mubr.f32.gmra.mrb[0].mxu0 %v140
  %v551 = vpop.f32.mrb[0].mxu0
  %v552 = vadd.f32 0.0, %v551
  %v553 = vpop.f32.mrb[0].mxu0
  %554 = vmatprep.mubr.f32.mxu0 %v281
  %555 = vmatmul.mubr.f32.gmra.mrb[0].mxu0 %v142
  %v556 = vpop.f32.mrb[0].mxu0
  %v557 = vadd.f32 0.0, %v556
  %v558 = vpop.f32.mrb[0].mxu0
  %559 = vmatprep.mubr.f32.mxu0 %v284
  %560 = vmatmul.mubr.f32.gmra.mrb[0].mxu0 %v144
  %v561 = vpop.f32.mrb[0].mxu0
  %v562 = vadd.f32 0.0, %v561
  %v563 = vpop.f32.mrb[0].mxu0
  %564 = vmatprep.mubr.f32.mxu0 %v287
  %565 = vmatmul.mubr.f32.gmra.mrb[0].mxu0 %v146
  %v566 = vpop.f32.mrb[0].mxu0
  %v567 = vadd.f32 0.0, %v566
  %v568 = vpop.f32.mrb[0].mxu0
  %569 = vmatprep.mubr.f32.mxu0 %v290
  %570 = vmatmul.mubr.f32.gmra.mrb[0].mxu0 %v148
  %v571 = vpop.f32.mrb[0].mxu0
  %v572 = vadd.f32 0.0, %v571
  %v573 = vpop.f32.mrb[0].mxu0
  %574 = vmatprep.mubr.f32.mxu0 %v293
  %575 = vmatmul.mubr.f32.gmra.mrb[0].mxu0 %v150
  %v576 = vpop.f32.mrb[0].mxu0
  %v577 = vadd.f32 0.0, %v576
  %v578 = vpop.f32.mrb[0].mxu0
  %579 = vmatprep.mubr.f32.mxu0 %v296
  %580 = vmatmul.mubr.f32.gmra.mrb[0].mxu0 %v152
  %v581 = vpop.f32.mrb[0].mxu0
  %v582 = vadd.f32 0.0, %v581
  %v583 = vpop.f32.mrb[0].mxu0
  %584 = vmatprep.mubr.f32.mxu0 %v299
  %585 = vmatmul.mubr.f32.gmra.mrb[0].mxu0 %v154
  %v586 = vpop.f32.mrb[0].mxu0
  %v587 = vadd.f32 0.0, %v586
  %v588 = vpop.f32.mrb[0].mxu0
  %589 = vmatprep.mubr.f32.mxu0 %v302
  %590 = vmatmul.mubr.f32.gmra.mrb[0].mxu0 %v156
  %v591 = vpop.f32.mrb[0].mxu0
  %v592 = vadd.f32 0.0, %v591
  %v593 = vpop.f32.mrb[0].mxu0
  %594 = vmatprep.mubr.f32.mxu0 %v305
  %595 = vmatmul.mubr.f32.gmra.mrb[0].mxu0 %v158
  %v596 = vpop.f32.mrb[0].mxu0
  %v597 = vadd.f32 0.0, %v596
  %v598 = vpop.f32.mrb[0].mxu0
  %599 = vmatprep.mubr.f32.mxu0 %v308
  %600 = vmatmul.mubr.f32.gmra.mrb[0].mxu0 %v160
  %v601 = vpop.f32.mrb[0].mxu0
  %v602 = vadd.f32 0.0, %v601
  %v603 = vpop.f32.mrb[0].mxu0
  %604 = vmatprep.mubr.f32.mxu0 %v311
  %605 = vmatmul.mubr.f32.gmra.mrb[0].mxu0 %v162
  %v606 = vpop.f32.mrb[0].mxu0
  %v607 = vadd.f32 0.0, %v606
  %v608 = vpop.f32.mrb[0].mxu0
  %609 = vmatprep.mubr.f32.mxu0 %v314
  %610 = vmatmul.mubr.f32.gmra.mrb[0].mxu0 %v164
  %v611 = vpop.f32.mrb[0].mxu0
  %v612 = vadd.f32 0.0, %v611
  %v613 = vpop.f32.mrb[0].mxu0
  %614 = vmatprep.mubr.f32.mxu0 %v317
  %615 = vmatmul.mubr.f32.gmra.mrb[0].mxu0 %v166
  %v616 = vpop.f32.mrb[0].mxu0
  %v617 = vadd.f32 0.0, %v616
  %v618 = vpop.f32.mrb[0].mxu0
  %619 = vmatprep.mubr.f32.mxu0 %v320
  %620 = vmatmul.mubr.f32.gmra.mrb[0].mxu0 %v168
  %v621 = vpop.f32.mrb[0].mxu0
  %v622 = vadd.f32 0.0, %v621
  %v623 = vpop.f32.mrb[0].mxu0
  %624 = vmatprep.mubr.f32.mxu0 %v323
  %625 = vmatmul.mubr.f32.gmra.mrb[0].mxu0 %v170
  %v626 = vpop.f32.mrb[0].mxu0
  %v627 = vadd.f32 0.0, %v626
  %v628 = vpop.f32.mrb[0].mxu0
  %629 = vmatprep.mubr.f32.mxu0 %v326
  %630 = vmatmul.mubr.f32.gmra.mrb[0].mxu0 %v172
  %v631 = vpop.f32.mrb[0].mxu0
  %v632 = vadd.f32 0.0, %v631
  %v633 = vpop.f32.mrb[0].mxu0
  %634 = vmatprep.mubr.f32.mxu0 %v329
  %635 = vmatmul.mubr.f32.gmra.mrb[0].mxu0 %v174
  %v636 = vpop.f32.mrb[0].mxu0
  %v637 = vadd.f32 0.0, %v636
  %v638 = vpop.f32.mrb[0].mxu0
  %639 = vmatprep.mubr.f32.mxu0 %v332
  %640 = vmatmul.mubr.f32.gmra.mrb[0].mxu0 %v176
  %v641 = vpop.f32.mrb[0].mxu0
  %v642 = vadd.f32 0.0, %v641
  %v643 = vpop.f32.mrb[0].mxu0
  %644 = vmatprep.mubr.f32.mxu0 %v335
  %645 = vmatmul.mubr.f32.gmra.mrb[0].mxu0 %v178
  %v646 = vpop.f32.mrb[0].mxu0
  %v647 = vadd.f32 0.0, %v646
  %v648 = vpop.f32.mrb[0].mxu0
  %649 = vmatprep.mubr.f32.mxu0 %v338
  %650 = vmatmul.mubr.f32.gmra.mrb[0].mxu0 %v180
  %v651 = vpop.f32.mrb[0].mxu0
  %v652 = vadd.f32 0.0, %v651
  %v653 = vpop.f32.mrb[0].mxu0
  %654 = vmatprep.mubr.f32.mxu0 %v341
  %655 = vmatmul.mubr.f32.gmra.mrb[0].mxu0 %v182
  %v656 = vpop.f32.mrb[0].mxu0
  %v657 = vadd.f32 0.0, %v656
  %v658 = vpop.f32.mrb[0].mxu0
  %659 = vmatprep.mubr.f32.mxu0 %v344
  %660 = vmatmul.mubr.f32.gmra.mrb[0].mxu0 %v184
  %v661 = vpop.f32.mrb[0].mxu0
  %v662 = vadd.f32 0.0, %v661
  %v663 = vpop.f32.mrb[0].mxu0
  %664 = vmatprep.mubr.f32.mxu0 %v347
  %665 = vmatmul.mubr.f32.gmra.mrb[0].mxu0 %v186
  %v666 = vpop.f32.mrb[0].mxu0
  %v667 = vadd.f32 0.0, %v666
  %v668 = vpop.f32.mrb[0].mxu0
  %669 = vmatprep.mubr.f32.mxu0 %v350
  %670 = vmatmul.mubr.f32.gmra.mrb[0].mxu0 %v188
  %v671 = vpop.f32.mrb[0].mxu0
  %v672 = vadd.f32 0.0, %v671
  %v673 = vpop.f32.mrb[0].mxu0
  %674 = vmatprep.mubr.f32.mxu0 %v353
  %675 = vmatmul.mubr.f32.gmra.mrb[0].mxu0 %v190
  %v676 = vpop.f32.mrb[0].mxu0
  %v677 = vadd.f32 0.0, %v676
  %v678 = vpop.f32.mrb[0].mxu0
  %679 = vmatprep.mubr.f32.mxu0 %v356
  %680 = vmatmul.mubr.f32.gmra.mrb[0].mxu0 %v192
  %v681 = vpop.f32.mrb[0].mxu0
  %v682 = vadd.f32 0.0, %v681
  %v683 = vpop.f32.mrb[0].mxu0
  %684 = vmatprep.mubr.f32.mxu0 %v359
  %685 = vmatmul.mubr.f32.gmra.mrb[0].mxu0 %v194
  %v686 = vpop.f32.mrb[0].mxu0
  %v687 = vadd.f32 0.0, %v686
  %v688 = vpop.f32.mrb[0].mxu0
  %689 = vmatprep.mubr.f32.mxu0 %v362
  %690 = vmatmul.mubr.f32.gmra.mrb[0].mxu0 %v196
  %v691 = vpop.f32.mrb[0].mxu0
  %v692 = vadd.f32 0.0, %v691
  %v693 = vpop.f32.mrb[0].mxu0
  %694 = vmatprep.mubr.f32.mxu0 %v365
  %695 = vmatmul.mubr.f32.gmra.mrb[0].mxu0 %v198
  %v696 = vpop.f32.mrb[0].mxu0
  %v697 = vadd.f32 0.0, %v696
  %v698 = vpop.f32.mrb[0].mxu0
  %699 = vmatprep.mubr.f32.mxu0 %v368
  %700 = vmatmul.mubr.f32.gmra.mrb[0].mxu0 %v200
  %v701 = vpop.f32.mrb[0].mxu0
  %v702 = vadd.f32 0.0, %v701
  %v703 = vpop.f32.mrb[0].mxu0
  %704 = vmatprep.mubr.f32.mxu0 %v371
  %705 = vmatmul.mubr.f32.gmra.mrb[0].mxu0 %v202
  %v706 = vpop.f32.mrb[0].mxu0
  %v707 = vadd.f32 0.0, %v706
  %v708 = vpop.f32.mrb[0].mxu0
  %709 = vmatprep.mubr.f32.mxu0 %v374
  %710 = vmatmul.mubr.f32.gmra.mrb[0].mxu0 %v204
  %v711 = vpop.f32.mrb[0].mxu0
  %v712 = vadd.f32 0.0, %v711
  %v713 = vpop.f32.mrb[0].mxu0
  %714 = vmatprep.mubr.f32.mxu0 %v377
  %715 = vmatmul.mubr.f32.gmra.mrb[0].mxu0 %v206
  %v716 = vpop.f32.mrb[0].mxu0
  %v717 = vadd.f32 0.0, %v716
  %v718 = vpop.f32.mrb[0].mxu0
  %719 = vmatprep.mubr.f32.mxu0 %v380
  %720 = vmatmul.mubr.f32.gmra.mrb[0].mxu0 %v208
  %v721 = vpop.f32.mrb[0].mxu0
  %v722 = vadd.f32 0.0, %v721
  %v723 = vpop.f32.mrb[0].mxu0
  %724 = vmatprep.mubr.f32.mxu0 %v383
  %725 = vmatmul.mubr.f32.gmra.mrb[0].mxu0 %v210
  %v726 = vpop.f32.mrb[0].mxu0
  %v727 = vadd.f32 0.0, %v726
  %v728 = vpop.f32.mrb[0].mxu0
  %729 = vmatprep.mubr.f32.mxu0 %v386
  %730 = vmatmul.mubr.f32.gmra.mrb[0].mxu0 %v212
  %v731 = vpop.f32.mrb[0].mxu0
  %v732 = vadd.f32 0.0, %v731
  %v733 = vpop.f32.mrb[0].mxu0
  %734 = vmatprep.mubr.f32.mxu0 %v389
  %735 = vmatmul.mubr.f32.gmra.mrb[0].mxu0 %v214
  %v736 = vpop.f32.mrb[0].mxu0
  %v737 = vadd.f32 0.0, %v736
  %v738 = vpop.f32.mrb[0].mxu0
  %739 = vmatprep.mubr.f32.mxu0 %v392
  %740 = vmatmul.mubr.f32.gmra.mrb[0].mxu0 %v216
  %v741 = vpop.f32.mrb[0].mxu0
  %v742 = vadd.f32 0.0, %v741
  %v743 = vpop.f32.mrb[0].mxu0
  %744 = vmatprep.mubr.f32.mxu0 %v395
  %745 = vmatmul.mubr.f32.gmra.mrb[0].mxu0 %v218
  %v746 = vpop.f32.mrb[0].mxu0
  %v747 = vadd.f32 0.0, %v746
  %v748 = vpop.f32.mrb[0].mxu0
  %749 = vmatprep.mubr.f32.mxu0 %v398
  %750 = vmatmul.mubr.f32.gmra.mrb[0].mxu0 %v220
  %v751 = vpop.f32.mrb[0].mxu0
  %v752 = vadd.f32 0.0, %v751
  %v753 = vpop.f32.mrb[0].mxu0
  %754 = vmatprep.mubr.f32.mxu0 %v401
  %755 = vmatmul.mubr.f32.gmra.mrb[0].mxu0 %v222
  %v756 = vpop.f32.mrb[0].mxu0
  %v757 = vadd.f32 0.0, %v756
  %v758 = vpop.f32.mrb[0].mxu0
  %759 = vmatprep.mubr.f32.mxu0 %v404
  %760 = vmatmul.mubr.f32.gmra.mrb[0].mxu0 %v224
  %v761 = vpop.f32.mrb[0].mxu0
  %v762 = vadd.f32 0.0, %v761
  %v763 = vpop.f32.mrb[0].mxu0
  %764 = vmatprep.mubr.f32.mxu0 %v407
  %765 = vmatmul.mubr.f32.gmra.mrb[0].mxu0 %v226
  %v766 = vpop.f32.mrb[0].mxu0
  %v767 = vadd.f32 0.0, %v766
  %v768 = vpop.f32.mrb[0].mxu0
  %769 = vmatprep.mubr.f32.mxu0 %v410
  %770 = vmatmul.mubr.f32.gmra.mrb[0].mxu0 %v228
  %v771 = vpop.f32.mrb[0].mxu0
  %v772 = vadd.f32 0.0, %v771
  %v773 = vpop.f32.mrb[0].mxu0
  %774 = vmatprep.mubr.f32.mxu0 %v413
  %775 = vmatmul.mubr.f32.gmra.mrb[0].mxu0 %v230
  %v776 = vpop.f32.mrb[0].mxu0
  %v777 = vadd.f32 0.0, %v776
  %v778 = vpop.f32.mrb[0].mxu0
  %779 = vmatprep.mubr.f32.mxu0 %v416
  %780 = vmatmul.mubr.f32.gmra.mrb[0].mxu0 %v232
  %v781 = vpop.f32.mrb[0].mxu0
  %v782 = vadd.f32 0.0, %v781
  %v783 = vpop.f32.mrb[0].mxu0
  %784 = vmatprep.mubr.f32.mxu0 %v419
  %785 = vmatmul.mubr.f32.gmra.mrb[0].mxu0 %v234
  %v786 = vpop.f32.mrb[0].mxu0
  %v787 = vadd.f32 0.0, %v786
  %v788 = vpop.f32.mrb[0].mxu0
  %789 = vmatprep.mubr.f32.mxu0 %v422
  %790 = vmatmul.mubr.f32.gmra.mrb[0].mxu0 %v236
  %v791 = vpop.f32.mrb[0].mxu0
  %v792 = vadd.f32 0.0, %v791
  %v793 = vpop.f32.mrb[0].mxu0
  %794 = vmatprep.mubr.f32.mxu0 %v425
  %795 = vmatmul.mubr.f32.gmra.mrb[0].mxu0 %v238
  %v796 = vpop.f32.mrb[0].mxu0
  %v797 = vadd.f32 0.0, %v796
  %v798 = vpop.f32.mrb[0].mxu0
  %799 = vmatprep.mubr.f32.mxu0 %v428
  %800 = vmatmul.mubr.f32.gmra.mrb[0].mxu0 %v240
  %v801 = vpop.f32.mrb[0].mxu0
  %v802 = vadd.f32 0.0, %v801
  %v803 = vpop.f32.mrb[0].mxu0
  %804 = vmatprep.mubr.f32.mxu0 %v431
  %805 = vmatmul.mubr.f32.gmra.mrb[0].mxu0 %v242
  %v806 = vpop.f32.mrb[0].mxu0
  %v807 = vadd.f32 0.0, %v806
  %v808 = vpop.f32.mrb[0].mxu0
  %809 = vmatprep.mubr.f32.mxu0 %v434
  %810 = vmatmul.mubr.f32.gmra.mrb[0].mxu0 %v244
  %v811 = vpop.f32.mrb[0].mxu0
  %v812 = vadd.f32 0.0, %v811
  %v813 = vpop.f32.mrb[0].mxu0
  %814 = vmatprep.mubr.f32.mxu0 %v437
  %815 = vmatmul.mubr.f32.gmra.mrb[0].mxu0 %v246
  %v816 = vpop.f32.mrb[0].mxu0
  %v817 = vadd.f32 0.0, %v816
  %v818 = vpop.f32.mrb[0].mxu0
  %819 = vmatprep.mubr.f32.mxu0 %v440
  %820 = vmatmul.mubr.f32.gmra.mrb[0].mxu0 %v248
  %v821 = vpop.f32.mrb[0].mxu0
  %v822 = vadd.f32 0.0, %v821
  %v823 = vpop.f32.mrb[0].mxu0
  %824 = vmatprep.mubr.f32.mxu0 %v443
  %825 = vmatmul.mubr.f32.gmra.mrb[0].mxu0 %v250
  %v826 = vpop.f32.mrb[0].mxu0
  %v827 = vadd.f32 0.0, %v826
  %v828 = vpop.f32.mrb[0].mxu0
  %829 = vdwg.mxu0
  %v830 = vmax.f32 %v512, 0.0
  %v831 = vmax.f32 %v517, 0.0
  %v832 = vmax.f32 %v522, 0.0
  %v833 = vmax.f32 %v527, 0.0
  %v834 = vmax.f32 %v532, 0.0
  %v835 = vmax.f32 %v537, 0.0
  %v836 = vmax.f32 %v542, 0.0
  %v837 = vmax.f32 %v547, 0.0
  %v838 = vmax.f32 %v552, 0.0
  %v839 = vmax.f32 %v557, 0.0
  %v840 = vmax.f32 %v562, 0.0
  %v841 = vmax.f32 %v567, 0.0
  %v842 = vmax.f32 %v572, 0.0
  %v843 = vmax.f32 %v577, 0.0
  %v844 = vmax.f32 %v582, 0.0
  %v845 = vmax.f32 %v587, 0.0
  %v846 = vmax.f32 %v592, 0.0
  %v847 = vmax.f32 %v597, 0.0
  %v848 = vmax.f32 %v602, 0.0
  %v849 = vmax.f32 %v607, 0.0
  %v850 = vmax.f32 %v612, 0.0
  %v851 = vmax.f32 %v617, 0.0
  %v852 = vmax.f32 %v622, 0.0
  %v853 = vmax.f32 %v627, 0.0
  %v854 = vmax.f32 %v632, 0.0
  %v855 = vmax.f32 %v637, 0.0
  %v856 = vmax.f32 %v642, 0.0
  %v857 = vmax.f32 %v647, 0.0
  %v858 = vmax.f32 %v652, 0.0
  %v859 = vmax.f32 %v657, 0.0
  %v860 = vmax.f32 %v662, 0.0
  %v861 = vmax.f32 %v667, 0.0
  %v862 = vmax.f32 %v672, 0.0
  %v863 = vmax.f32 %v677, 0.0
  %v864 = vmax.f32 %v682, 0.0
  %v865 = vmax.f32 %v687, 0.0
  %v866 = vmax.f32 %v692, 0.0
  %v867 = vmax.f32 %v697, 0.0
  %v868 = vmax.f32 %v702, 0.0
  %v869 = vmax.f32 %v707, 0.0
  %v870 = vmax.f32 %v712, 0.0
  %v871 = vmax.f32 %v717, 0.0
  %v872 = vmax.f32 %v722, 0.0
  %v873 = vmax.f32 %v727, 0.0
  %v874 = vmax.f32 %v732, 0.0
  %v875 = vmax.f32 %v737, 0.0
  %v876 = vmax.f32 %v742, 0.0
  %v877 = vmax.f32 %v747, 0.0
  %v878 = vmax.f32 %v752, 0.0
  %v879 = vmax.f32 %v757, 0.0
  %v880 = vmax.f32 %v762, 0.0
  %v881 = vmax.f32 %v767, 0.0
  %v882 = vmax.f32 %v772, 0.0
  %v883 = vmax.f32 %v777, 0.0
  %v884 = vmax.f32 %v782, 0.0
  %v885 = vmax.f32 %v787, 0.0
  %v886 = vmax.f32 %v792, 0.0
  %v887 = vmax.f32 %v797, 0.0
  %v888 = vmax.f32 %v802, 0.0
  %v889 = vmax.f32 %v807, 0.0
  %v890 = vmax.f32 %v812, 0.0
  %v891 = vmax.f32 %v817, 0.0
  %v892 = vmax.f32 %v822, 0.0
  %v893 = vmax.f32 %v827, 0.0
  %v894 = vmax.f32 %v830, %v831
  %v895 = vrot.slane %v894, 4
  %v896 = vmax.f32 %v894, %v895
  %v897 = vrot.slane %v896, 2
  %v898 = vmax.f32 %v896, %v897
  %v899 = vrot.slane %v898, 1
  %v900 = vmax.f32 %v898, %v899
  %v901 = vmax.f32 %v832, %v833
  %v902 = vrot.slane %v901, 4
  %v903 = vmax.f32 %v901, %v902
  %v904 = vrot.slane %v903, 2
  %v905 = vmax.f32 %v903, %v904
  %v906 = vrot.slane %v905, 1
  %v907 = vmax.f32 %v905, %v906
  %v908 = vmax.f32 %v834, %v835
  %v909 = vrot.slane %v908, 4
  %v910 = vmax.f32 %v908, %v909
  %v911 = vrot.slane %v910, 2
  %v912 = vmax.f32 %v910, %v911
  %v913 = vrot.slane %v912, 1
  %v914 = vmax.f32 %v912, %v913
  %v915 = vmax.f32 %v836, %v837
  %v916 = vrot.slane %v915, 4
  %v917 = vmax.f32 %v915, %v916
  %v918 = vrot.slane %v917, 2
  %v919 = vmax.f32 %v917, %v918
  %v920 = vrot.slane %v919, 1
  %v921 = vmax.f32 %v919, %v920
  %v922 = vmax.f32 %v838, %v839
  %v923 = vrot.slane %v922, 4
  %v924 = vmax.f32 %v922, %v923
  %v925 = vrot.slane %v924, 2
  %v926 = vmax.f32 %v924, %v925
  %v927 = vrot.slane %v926, 1
  %v928 = vmax.f32 %v926, %v927
  %v929 = vmax.f32 %v840, %v841
  %v930 = vrot.slane %v929, 4
  %v931 = vmax.f32 %v929, %v930
  %v932 = vrot.slane %v931, 2
  %v933 = vmax.f32 %v931, %v932
  %v934 = vrot.slane %v933, 1
  %v935 = vmax.f32 %v933, %v934
  %v936 = vmax.f32 %v842, %v843
  %v937 = vrot.slane %v936, 4
  %v938 = vmax.f32 %v936, %v937
  %v939 = vrot.slane %v938, 2
  %v940 = vmax.f32 %v938, %v939
  %v941 = vrot.slane %v940, 1
  %v942 = vmax.f32 %v940, %v941
  %v943 = vmax.f32 %v844, %v845
  %v944 = vrot.slane %v943, 4
  %v945 = vmax.f32 %v943, %v944
  %v946 = vrot.slane %v945, 2
  %v947 = vmax.f32 %v945, %v946
  %v948 = vrot.slane %v947, 1
  %v949 = vmax.f32 %v947, %v948
  %v950 = vmax.f32 %v846, %v847
  %v951 = vrot.slane %v950, 4
  %v952 = vmax.f32 %v950, %v951
  %v953 = vrot.slane %v952, 2
  %v954 = vmax.f32 %v952, %v953
  %v955 = vrot.slane %v954, 1
  %v956 = vmax.f32 %v954, %v955
  %v957 = vmax.f32 %v848, %v849
  %v958 = vrot.slane %v957, 4
  %v959 = vmax.f32 %v957, %v958
  %v960 = vrot.slane %v959, 2
  %v961 = vmax.f32 %v959, %v960
  %v962 = vrot.slane %v961, 1
  %v963 = vmax.f32 %v961, %v962
  %v964 = vmax.f32 %v850, %v851
  %v965 = vrot.slane %v964, 4
  %v966 = vmax.f32 %v964, %v965
  %v967 = vrot.slane %v966, 2
  %v968 = vmax.f32 %v966, %v967
  %v969 = vrot.slane %v968, 1
  %v970 = vmax.f32 %v968, %v969
  %v971 = vmax.f32 %v852, %v853
  %v972 = vrot.slane %v971, 4
  %v973 = vmax.f32 %v971, %v972
  %v974 = vrot.slane %v973, 2
  %v975 = vmax.f32 %v973, %v974
  %v976 = vrot.slane %v975, 1
  %v977 = vmax.f32 %v975, %v976
  %v978 = vmax.f32 %v854, %v855
  %v979 = vrot.slane %v978, 4
  %v980 = vmax.f32 %v978, %v979
  %v981 = vrot.slane %v980, 2
  %v982 = vmax.f32 %v980, %v981
  %v983 = vrot.slane %v982, 1
  %v984 = vmax.f32 %v982, %v983
  %v985 = vmax.f32 %v856, %v857
  %v986 = vrot.slane %v985, 4
  %v987 = vmax.f32 %v985, %v986
  %v988 = vrot.slane %v987, 2
  %v989 = vmax.f32 %v987, %v988
  %v990 = vrot.slane %v989, 1
  %v991 = vmax.f32 %v989, %v990
  %v992 = vmax.f32 %v858, %v859
  %v993 = vrot.slane %v992, 4
  %v994 = vmax.f32 %v992, %v993
  %v995 = vrot.slane %v994, 2
  %v996 = vmax.f32 %v994, %v995
  %v997 = vrot.slane %v996, 1
  %v998 = vmax.f32 %v996, %v997
  %v999 = vmax.f32 %v860, %v861
  %v1000 = vrot.slane %v999, 4
  %v1001 = vmax.f32 %v999, %v1000
  %v1002 = vrot.slane %v1001, 2
  %v1003 = vmax.f32 %v1001, %v1002
  %v1004 = vrot.slane %v1003, 1
  %v1005 = vmax.f32 %v1003, %v1004
  %v1006 = vmax.f32 %v862, %v863
  %v1007 = vrot.slane %v1006, 4
  %v1008 = vmax.f32 %v1006, %v1007
  %v1009 = vrot.slane %v1008, 2
  %v1010 = vmax.f32 %v1008, %v1009
  %v1011 = vrot.slane %v1010, 1
  %v1012 = vmax.f32 %v1010, %v1011
  %v1013 = vmax.f32 %v864, %v865
  %v1014 = vrot.slane %v1013, 4
  %v1015 = vmax.f32 %v1013, %v1014
  %v1016 = vrot.slane %v1015, 2
  %v1017 = vmax.f32 %v1015, %v1016
  %v1018 = vrot.slane %v1017, 1
  %v1019 = vmax.f32 %v1017, %v1018
  %v1020 = vmax.f32 %v866, %v867
  %v1021 = vrot.slane %v1020, 4
  %v1022 = vmax.f32 %v1020, %v1021
  %v1023 = vrot.slane %v1022, 2
  %v1024 = vmax.f32 %v1022, %v1023
  %v1025 = vrot.slane %v1024, 1
  %v1026 = vmax.f32 %v1024, %v1025
  %v1027 = vmax.f32 %v868, %v869
  %v1028 = vrot.slane %v1027, 4
  %v1029 = vmax.f32 %v1027, %v1028
  %v1030 = vrot.slane %v1029, 2
  %v1031 = vmax.f32 %v1029, %v1030
  %v1032 = vrot.slane %v1031, 1
  %v1033 = vmax.f32 %v1031, %v1032
  %v1034 = vmax.f32 %v870, %v871
  %v1035 = vrot.slane %v1034, 4
  %v1036 = vmax.f32 %v1034, %v1035
  %v1037 = vrot.slane %v1036, 2
  %v1038 = vmax.f32 %v1036, %v1037
  %v1039 = vrot.slane %v1038, 1
  %v1040 = vmax.f32 %v1038, %v1039
  %v1041 = vmax.f32 %v872, %v873
  %v1042 = vrot.slane %v1041, 4
  %v1043 = vmax.f32 %v1041, %v1042
  %v1044 = vrot.slane %v1043, 2
  %v1045 = vmax.f32 %v1043, %v1044
  %v1046 = vrot.slane %v1045, 1
  %v1047 = vmax.f32 %v1045, %v1046
  %v1048 = vmax.f32 %v874, %v875
  %v1049 = vrot.slane %v1048, 4
  %v1050 = vmax.f32 %v1048, %v1049
  %v1051 = vrot.slane %v1050, 2
  %v1052 = vmax.f32 %v1050, %v1051
  %v1053 = vrot.slane %v1052, 1
  %v1054 = vmax.f32 %v1052, %v1053
  %v1055 = vmax.f32 %v876, %v877
  %v1056 = vrot.slane %v1055, 4
  %v1057 = vmax.f32 %v1055, %v1056
  %v1058 = vrot.slane %v1057, 2
  %v1059 = vmax.f32 %v1057, %v1058
  %v1060 = vrot.slane %v1059, 1
  %v1061 = vmax.f32 %v1059, %v1060
  %v1062 = vmax.f32 %v878, %v879
  %v1063 = vrot.slane %v1062, 4
  %v1064 = vmax.f32 %v1062, %v1063
  %v1065 = vrot.slane %v1064, 2
  %v1066 = vmax.f32 %v1064, %v1065
  %v1067 = vrot.slane %v1066, 1
  %v1068 = vmax.f32 %v1066, %v1067
  %v1069 = vmax.f32 %v880, %v881
  %v1070 = vrot.slane %v1069, 4
  %v1071 = vmax.f32 %v1069, %v1070
  %v1072 = vrot.slane %v1071, 2
  %v1073 = vmax.f32 %v1071, %v1072
  %v1074 = vrot.slane %v1073, 1
  %v1075 = vmax.f32 %v1073, %v1074
  %v1076 = vmax.f32 %v882, %v883
  %v1077 = vrot.slane %v1076, 4
  %v1078 = vmax.f32 %v1076, %v1077
  %v1079 = vrot.slane %v1078, 2
  %v1080 = vmax.f32 %v1078, %v1079
  %v1081 = vrot.slane %v1080, 1
  %v1082 = vmax.f32 %v1080, %v1081
  %v1083 = vmax.f32 %v884, %v885
  %v1084 = vrot.slane %v1083, 4
  %v1085 = vmax.f32 %v1083, %v1084
  %v1086 = vrot.slane %v1085, 2
  %v1087 = vmax.f32 %v1085, %v1086
  %v1088 = vrot.slane %v1087, 1
  %v1089 = vmax.f32 %v1087, %v1088
  %v1090 = vmax.f32 %v886, %v887
  %v1091 = vrot.slane %v1090, 4
  %v1092 = vmax.f32 %v1090, %v1091
  %v1093 = vrot.slane %v1092, 2
  %v1094 = vmax.f32 %v1092, %v1093
  %v1095 = vrot.slane %v1094, 1
  %v1096 = vmax.f32 %v1094, %v1095
  %v1097 = vmax.f32 %v888, %v889
  %v1098 = vrot.slane %v1097, 4
  %v1099 = vmax.f32 %v1097, %v1098
  %v1100 = vrot.slane %v1099, 2
  %v1101 = vmax.f32 %v1099, %v1100
  %v1102 = vrot.slane %v1101, 1
  %v1103 = vmax.f32 %v1101, %v1102
  %v1104 = vmax.f32 %v890, %v891
  %v1105 = vrot.slane %v1104, 4
  %v1106 = vmax.f32 %v1104, %v1105
  %v1107 = vrot.slane %v1106, 2
  %v1108 = vmax.f32 %v1106, %v1107
  %v1109 = vrot.slane %v1108, 1
  %v1110 = vmax.f32 %v1108, %v1109
  %v1111 = vmax.f32 %v892, %v893
  %v1112 = vrot.slane %v1111, 4
  %v1113 = vmax.f32 %v1111, %v1112
  %v1114 = vrot.slane %v1113, 2
  %v1115 = vmax.f32 %v1113, %v1114
  %v1116 = vrot.slane %v1115, 1
  %v1117 = vmax.f32 %v1115, %v1116
  %vm1150 = vcmask 1041409
  %v1151 = vsel %vm1150, %v907, %v900
  %vm1152 = vcmask 1042434
  %v1153 = vsel %vm1152, %v914, %v1151
  %vm1154 = vcmask 1043459
  %v1155 = vsel %vm1154, %v921, %v1153
  %vm1156 = vcmask 1044484
  %v1157 = vsel %vm1156, %v928, %v1155
  %vm1158 = vcmask 1045509
  %v1159 = vsel %vm1158, %v935, %v1157
  %vm1160 = vcmask 1046534
  %v1161 = vsel %vm1160, %v942, %v1159
  %vm1162 = vcmask 1047559
  %v1163 = vsel %vm1162, %v949, %v1161
  %v1164 = vsel %vm1150, %v963, %v956
  %v1165 = vsel %vm1152, %v970, %v1164
  %v1166 = vsel %vm1154, %v977, %v1165
  %v1167 = vsel %vm1156, %v984, %v1166
  %v1168 = vsel %vm1158, %v991, %v1167
  %v1169 = vsel %vm1160, %v998, %v1168
  %v1170 = vsel %vm1162, %v1005, %v1169
  %v1171 = vsel %vm1150, %v1019, %v1012
  %v1172 = vsel %vm1152, %v1026, %v1171
  %v1173 = vsel %vm1154, %v1033, %v1172
  %v1174 = vsel %vm1156, %v1040, %v1173
  %v1175 = vsel %vm1158, %v1047, %v1174
  %v1176 = vsel %vm1160, %v1054, %v1175
  %v1177 = vsel %vm1162, %v1061, %v1176
  %v1178 = vsel %vm1150, %v1075, %v1068
  %v1179 = vsel %vm1152, %v1082, %v1178
  %v1180 = vsel %vm1154, %v1089, %v1179
  %v1181 = vsel %vm1156, %v1096, %v1180
  %v1182 = vsel %vm1158, %v1103, %v1181
  %v1183 = vsel %vm1160, %v1110, %v1182
  %v1184 = vsel %vm1162, %v1117, %v1183
  %1189 = vst [vmem:[%s3] sm:$0xff] %v1163
  %1190 = vst [vmem:[%s3 + $0x8] sm:$0xff] %v1170
  %1191 = vst [vmem:[%s3 + $0x10] sm:$0xff] %v1177
  %1192 = vst [vmem:[%s3 + $0x18] sm:$0xff] %v1184
  // Predicated region
  $region14: #{pillar_of_fafe_forward.1} parent=0 // pred_check
    _
  $region15: #{pillar_of_fafe_forward.1} parent=0 // pred_check_branch
    %1194 = sbr.rel (0) target = $region17
  $region16: #{pillar_of_fafe_forward.1} parent=0 // pred_region
    _
  $region17: #{pillar_of_fafe_forward.1} parent=0 // pred_fallthru
    _
  // Predicated region
  $region18: #{pillar_of_fafe_forward.1} parent=0 // pred_check
    _
  $region19: #{pillar_of_fafe_forward.1} parent=0 // pred_check_branch
    %1196 = sbr.rel (0) target = $region21
  $region20: #{pillar_of_fafe_forward.1} parent=0 // pred_region
    _
  $region21: #{pillar_of_fafe_forward.1} parent=0 // pred_fallthru
    _

</llo_original>
